<compile_context>
chip_gen: v7x
topology: tpu7x:2x2x1
jax: 0.10.0
libtpu: 0.0.40
codegen_flags: <defaults>
</compile_context>

<pallas_src>
import jax
import jax.numpy as jnp
from jax import lax
from jax.experimental import pallas as pl
from jax.experimental.pallas import tpu as pltpu


def _dwconv_kernel(top_ref, x_ref, bot_ref, w_ref, b_ref, o_ref):
    # top_ref: (W, TC)       row above this H-tile (clamped; masked at i==0)
    # x_ref  : (TH, W, TC)   main tile
    # bot_ref: (W, TC)       row below this H-tile (clamped; masked at last i)
    # w_ref  : (3, 3, TC)    depthwise weights
    # b_ref  : (1, TC)       bias
    # o_ref  : (TH, W, TC)   output tile
    TH, W, TC = o_ref.shape
    i = pl.program_id(1)
    n_h = pl.num_programs(1)
    f32 = jnp.float32

    # ---- hoisted once per grid step -------------------------------------
    w = w_ref[...].astype(f32)                                       # (3,3,TC)
    # Pre-broadcast the nine weight taps + bias (no broadcast_in_dim re-emitted
    # inside the row loop).
    wb = [[jnp.broadcast_to(w[kh, kw][None, :], (W, TC)) for kw in range(3)]
          for kh in range(3)]
    bias_wc = jnp.broadcast_to(b_ref[...].astype(f32), (W, TC))

    col = lax.broadcasted_iota(jnp.int32, (W, 1), 0)
    has_left = col >= 1            # output col w has a valid left neighbour
    has_right = col <= W - 2       # output col w has a valid right neighbour

    zero_row = jnp.zeros((W, TC), f32)
    top_row = jnp.where(i > 0, top_ref[...].astype(f32), zero_row)
    bot_row = jnp.where(i < n_h - 1, bot_ref[...].astype(f32), zero_row)

    def variants(row):
        # (center, left-neighbour, right-neighbour) of one input row; computed
        # exactly once per input row and reused by the 3 output rows it feeds.
        left = jnp.where(has_left, pltpu.roll(row, shift=1, axis=0), 0.0)
        right = jnp.where(has_right, pltpu.roll(row, shift=W - 1, axis=0), 0.0)
        return row, left, right

    def accumulate(prev, cur, nxt):
        acc = bias_wc
        for kh, (c_, l_, r_) in enumerate((prev, cur, nxt)):
            acc = acc + l_ * wb[kh][0] + c_ * wb[kh][1] + r_ * wb[kh][2]
        return acc

    # ---- rolling row registers ------------------------------------------
    prev = variants(top_row)
    cur = variants(x_ref[0].astype(f32))

    def body(h, carry):
        prev, cur = carry
        nxt = variants(x_ref[h + 1].astype(f32))
        o_ref[h] = accumulate(prev, cur, nxt).astype(o_ref.dtype)
        return cur, nxt

    # fori_loop bounds vreg live ranges (static Python unroll does not);
    # the last row is peeled because its "next" row is the bottom halo.
    prev, cur = lax.fori_loop(0, TH - 1, body, (prev, cur))
    o_ref[TH - 1] = accumulate(prev, cur, variants(bot_row)).astype(o_ref.dtype)


def _vmem_capacity_bytes():
    try:
        return int(pltpu.get_tpu_info().vmem_capacity_bytes)
    except Exception:
        return 64 * 2**20  # conservative (v7x per-TC) fallback


def _pick_tile_h(H, B, W, TC, itemsize, budget_bytes, max_th=64):
    """Largest divisor of H (<= max_th) whose main block fits in budget_bytes.

    When B == 1, keep at least two H tiles so the grid has >= 2 steps and both
    v7x TensorCores get work.
    """
    best = 1
    for d in range(1, min(H, max_th) + 1):
        if H % d:
            continue
        if d * W * TC * itemsize > budget_bytes:
            continue
        if B == 1 and d == H and H > 1:
            continue
        best = d
    return best


def dwconv(x, weight, bias, H, W):
    """x: (B, N, C); weight: (C, 1, 3, 3) PyTorch depthwise OIHW; bias: (C,)."""
    B, N, C = x.shape
    assert N == H * W

    x_nhwc = x.reshape(B, H, W, C)                        # metadata-only reshape
    w_hwc = jnp.transpose(weight[:, 0, :, :], (1, 2, 0))  # (3, 3, C)
    b_c = bias.reshape(1, C)

    # Channel tiling: tile C on its own parallel grid axis when lane-aligned;
    # otherwise run the full (unpadded) C and accept a masked store tail.
    if C % 128 == 0:
        TC = 256 if C % 256 == 0 else 128
    else:
        TC = C
    n_c = C // TC

    itemsize = jnp.dtype(x.dtype).itemsize
    vmem_cap = _vmem_capacity_bytes()
    scoped_cap = vmem_cap // 2                 # leave headroom for internal scratch
    blk_budget = min(4 * 2**20, scoped_cap // 8)
    TH = _pick_tile_h(H, B, W, TC, itemsize, blk_budget)
    n_th = H // TH

    # Double-buffered in + out blocks + 2 halo rows + weights/bias.
    block_bytes = (4 * TH * W * TC + 4 * W * TC + 2 * 10 * TC) * itemsize
    vmem_limit = int(min(scoped_cap, max(16 * 2**20, 4 * block_bytes)))

    out = pl.pallas_call(
        _dwconv_kernel,
        out_shape=jax.ShapeDtypeStruct((B, H, W, C), x.dtype),
        grid_spec=pltpu.PrefetchScalarGridSpec(
            num_scalar_prefetch=0,
            grid=(B, n_th, n_c),
            in_specs=[
                # top halo row (clamped at the image edge; masked in-kernel)
                pl.BlockSpec((None, None, W, TC),
                             lambda b, i, c: (b, jnp.maximum(i * TH - 1, 0), 0, c)),
                # main H-tile
                pl.BlockSpec((None, TH, W, TC), lambda b, i, c: (b, i, 0, c)),
                # bottom halo row (clamped; masked in-kernel)
                pl.BlockSpec((None, None, W, TC),
                             lambda b, i, c: (b, jnp.minimum((i + 1) * TH, H - 1), 0, c)),
                pl.BlockSpec((3, 3, TC), lambda b, i, c: (0, 0, c)),
                pl.BlockSpec((1, TC), lambda b, i, c: (0, c)),
            ],
            out_specs=pl.BlockSpec((None, TH, W, TC), lambda b, i, c: (b, i, 0, c)),
        ),
        compiler_params=pltpu.CompilerParams(
            dimension_semantics=("parallel", "parallel", "parallel"),
            vmem_limit_bytes=vmem_limit),
    )(x_nhwc, x_nhwc, x_nhwc, w_hwc, b_c)

    return out.reshape(B, N, C)


def _reference_dwconv(x, weight, bias, H, W):
    """Pure-JAX reference using lax.conv_general_dilated (NHWC, depthwise)."""
    B, N, C = x.shape
    x_nhwc = x.reshape(B, H, W, C)
    w_hwio = jnp.transpose(weight, (2, 3, 1, 0))  # (3, 3, 1, C)
    y = lax.conv_general_dilated(
        x_nhwc, w_hwio,
        window_strides=(1, 1), padding="SAME",
        dimension_numbers=("NHWC", "HWIO", "NHWC"),
        feature_group_count=C)
    y = y + bias.reshape(1, 1, 1, C)
    return y.reshape(B, N, C)


if __name__ == "__main__":
    def run_case(key, B, H, W, C):
        kx, kw, kb = jax.random.split(key, 3)
        N = H * W
        x = jax.random.normal(kx, (B, N, C), dtype=jnp.float32)
        # PyTorch-like Conv2d init: kaiming-uniform with fan_in = 1*3*3 = 9.
        bound = 1.0 / (9 ** 0.5)
        weight = jax.random.uniform(kw, (C, 1, 3, 3), jnp.float32, -bound, bound)
        bias = jax.random.uniform(kb, (C,), jnp.float32, -bound, bound)

        y = jax.block_until_ready(dwconv(x, weight, bias, H, W))
        y_ref = jax.block_until_ready(_reference_dwconv(x, weight, bias, H, W))

        assert y.shape == (B, N, C), y.shape
        err = float(jnp.max(jnp.abs(y - y_ref)))
        assert jnp.allclose(y, y_ref, atol=1e-5, rtol=1e-5), err

    key = jax.random.PRNGKey(0)
    k1, k2 = jax.random.split(key)
    # Case 1: lane-aligned channels (C-tiled path), single H tile per batch.
    run_case(k1, B=2, H=32, W=16, C=128)
    # Case 2: unaligned channels (full-C path, no pad/slice), multi-tile H ->
    # exercises the cross-tile halo exchange and the B==1 grid-balance rule.
    run_case(k2, B=1, H=64, W=8, C=192)
    print("KERNEL_OK")
</pallas_src>

<mosaic_0001>
module attributes {stable_mosaic.version = 11 : i64} {
  func.func @_dwconv_kernel(%arg0: i32, %arg1: i32, %arg2: i32, %arg3: memref<1x1x16x128xf32, #tpu.memory_space<vmem>>, %arg4: memref<1x32x16x128xf32, #tpu.memory_space<vmem>>, %arg5: memref<1x1x16x128xf32, #tpu.memory_space<vmem>>, %arg6: memref<3x3x128xf32, #tpu.memory_space<vmem>>, %arg7: memref<1x128xf32, #tpu.memory_space<vmem>>, %arg8: memref<1x32x16x128xf32, #tpu.memory_space<vmem>>) attributes {dimension_semantics = [#tpu.dimension_semantics<parallel>, #tpu.dimension_semantics<parallel>, #tpu.dimension_semantics<parallel>], iteration_bounds = array<i64: 2, 1, 1>, scalar_prefetch = 0 : i64, scratch_operands = 0 : i64, tpu.core_type = #tpu.core_type<tc>, window_params = [{transform_indices = @transform_0, window_bounds = array<i64: 1, 1, 16, 128>}, {transform_indices = @transform_1, window_bounds = array<i64: 1, 32, 16, 128>}, {transform_indices = @transform_2, window_bounds = array<i64: 1, 1, 16, 128>}, {transform_indices = @transform_3, window_bounds = array<i64: 3, 3, 128>}, {transform_indices = @transform_4, window_bounds = array<i64: 1, 128>}, {transform_indices = @transform_5, window_bounds = array<i64: 1, 32, 16, 128>}]} {
    %c0 = arith.constant 0 : index
    %c0_0 = arith.constant 0 : index
    %c0_1 = arith.constant 0 : index
    %0 = vector.load %arg6[%c0, %c0_0, %c0_1] : memref<3x3x128xf32, #tpu.memory_space<vmem>>, vector<3x3x128xf32>
    %1 = vector.extract_strided_slice %0 {offsets = [0, 0, 0], sizes = [1, 1, 128], strides = [1, 1, 1]} : vector<3x3x128xf32> to vector<1x1x128xf32>
    %2 = vector.shape_cast %1 : vector<1x1x128xf32> to vector<128xf32>
    %3 = vector.shape_cast %2 : vector<128xf32> to vector<1x128xf32>
    %4 = vector.shape_cast %3 : vector<1x128xf32> to vector<1x128xf32>
    %5 = vector.broadcast %4 : vector<1x128xf32> to vector<16x128xf32>
    %6 = vector.extract_strided_slice %0 {offsets = [0, 1, 0], sizes = [1, 1, 128], strides = [1, 1, 1]} : vector<3x3x128xf32> to vector<1x1x128xf32>
    %7 = vector.shape_cast %6 : vector<1x1x128xf32> to vector<128xf32>
    %8 = vector.shape_cast %7 : vector<128xf32> to vector<1x128xf32>
    %9 = vector.shape_cast %8 : vector<1x128xf32> to vector<1x128xf32>
    %10 = vector.broadcast %9 : vector<1x128xf32> to vector<16x128xf32>
    %11 = vector.extract_strided_slice %0 {offsets = [0, 2, 0], sizes = [1, 1, 128], strides = [1, 1, 1]} : vector<3x3x128xf32> to vector<1x1x128xf32>
    %12 = vector.shape_cast %11 : vector<1x1x128xf32> to vector<128xf32>
    %13 = vector.shape_cast %12 : vector<128xf32> to vector<1x128xf32>
    %14 = vector.shape_cast %13 : vector<1x128xf32> to vector<1x128xf32>
    %15 = vector.broadcast %14 : vector<1x128xf32> to vector<16x128xf32>
    %16 = vector.extract_strided_slice %0 {offsets = [1, 0, 0], sizes = [1, 1, 128], strides = [1, 1, 1]} : vector<3x3x128xf32> to vector<1x1x128xf32>
    %17 = vector.shape_cast %16 : vector<1x1x128xf32> to vector<128xf32>
    %18 = vector.shape_cast %17 : vector<128xf32> to vector<1x128xf32>
    %19 = vector.shape_cast %18 : vector<1x128xf32> to vector<1x128xf32>
    %20 = vector.broadcast %19 : vector<1x128xf32> to vector<16x128xf32>
    %21 = vector.extract_strided_slice %0 {offsets = [1, 1, 0], sizes = [1, 1, 128], strides = [1, 1, 1]} : vector<3x3x128xf32> to vector<1x1x128xf32>
    %22 = vector.shape_cast %21 : vector<1x1x128xf32> to vector<128xf32>
    %23 = vector.shape_cast %22 : vector<128xf32> to vector<1x128xf32>
    %24 = vector.shape_cast %23 : vector<1x128xf32> to vector<1x128xf32>
    %25 = vector.broadcast %24 : vector<1x128xf32> to vector<16x128xf32>
    %26 = vector.extract_strided_slice %0 {offsets = [1, 2, 0], sizes = [1, 1, 128], strides = [1, 1, 1]} : vector<3x3x128xf32> to vector<1x1x128xf32>
    %27 = vector.shape_cast %26 : vector<1x1x128xf32> to vector<128xf32>
    %28 = vector.shape_cast %27 : vector<128xf32> to vector<1x128xf32>
    %29 = vector.shape_cast %28 : vector<1x128xf32> to vector<1x128xf32>
    %30 = vector.broadcast %29 : vector<1x128xf32> to vector<16x128xf32>
    %31 = vector.extract_strided_slice %0 {offsets = [2, 0, 0], sizes = [1, 1, 128], strides = [1, 1, 1]} : vector<3x3x128xf32> to vector<1x1x128xf32>
    %32 = vector.shape_cast %31 : vector<1x1x128xf32> to vector<128xf32>
    %33 = vector.shape_cast %32 : vector<128xf32> to vector<1x128xf32>
    %34 = vector.shape_cast %33 : vector<1x128xf32> to vector<1x128xf32>
    %35 = vector.broadcast %34 : vector<1x128xf32> to vector<16x128xf32>
    %36 = vector.extract_strided_slice %0 {offsets = [2, 1, 0], sizes = [1, 1, 128], strides = [1, 1, 1]} : vector<3x3x128xf32> to vector<1x1x128xf32>
    %37 = vector.shape_cast %36 : vector<1x1x128xf32> to vector<128xf32>
    %38 = vector.shape_cast %37 : vector<128xf32> to vector<1x128xf32>
    %39 = vector.shape_cast %38 : vector<1x128xf32> to vector<1x128xf32>
    %40 = vector.broadcast %39 : vector<1x128xf32> to vector<16x128xf32>
    %41 = vector.extract_strided_slice %0 {offsets = [2, 2, 0], sizes = [1, 1, 128], strides = [1, 1, 1]} : vector<3x3x128xf32> to vector<1x1x128xf32>
    %42 = vector.shape_cast %41 : vector<1x1x128xf32> to vector<128xf32>
    %43 = vector.shape_cast %42 : vector<128xf32> to vector<1x128xf32>
    %44 = vector.shape_cast %43 : vector<1x128xf32> to vector<1x128xf32>
    %45 = vector.broadcast %44 : vector<1x128xf32> to vector<16x128xf32>
    %c0_2 = arith.constant 0 : index
    %c0_3 = arith.constant 0 : index
    %46 = vector.load %arg7[%c0_2, %c0_3] : memref<1x128xf32, #tpu.memory_space<vmem>>, vector<1x128xf32>
    %47 = vector.shape_cast %46 : vector<1x128xf32> to vector<1x128xf32>
    %48 = vector.broadcast %47 : vector<1x128xf32> to vector<16x128xf32>
    %49 = tpu.iota {dimensions = array<i32: 0>} : vector<16x1xi32>
    %c1_i32 = arith.constant 1 : i32
    %50 = vector.broadcast %c1_i32 : i32 to vector<16x1xi32>
    %51 = arith.cmpi sge, %49, %50 : vector<16x1xi32>
    %c14_i32 = arith.constant 14 : i32
    %52 = vector.broadcast %c14_i32 : i32 to vector<16x1xi32>
    %53 = arith.cmpi sle, %49, %52 : vector<16x1xi32>
    %cst = arith.constant 0.000000e+00 : f32
    %54 = vector.broadcast %cst : f32 to vector<16x128xf32>
    %c0_i32 = arith.constant 0 : i32
    %55 = arith.cmpi sgt, %arg1, %c0_i32 : i32
    %c0_4 = arith.constant 0 : index
    %c0_5 = arith.constant 0 : index
    %c0_6 = arith.constant 0 : index
    %c0_7 = arith.constant 0 : index
    %56 = vector.load %arg3[%c0_4, %c0_5, %c0_6, %c0_7] : memref<1x1x16x128xf32, #tpu.memory_space<vmem>>, vector<1x1x16x128xf32>
    %57 = vector.shape_cast %56 : vector<1x1x16x128xf32> to vector<16x128xf32>
    %58 = arith.select %55, %57, %54 : vector<16x128xf32>
    %c0_i32_8 = arith.constant 0 : i32
    %59 = arith.cmpi slt, %arg1, %c0_i32_8 : i32
    %c0_9 = arith.constant 0 : index
    %c0_10 = arith.constant 0 : index
    %c0_11 = arith.constant 0 : index
    %c0_12 = arith.constant 0 : index
    %60 = vector.load %arg5[%c0_9, %c0_10, %c0_11, %c0_12] : memref<1x1x16x128xf32, #tpu.memory_space<vmem>>, vector<1x1x16x128xf32>
    %61 = vector.shape_cast %60 : vector<1x1x16x128xf32> to vector<16x128xf32>
    %62 = arith.select %59, %61, %54 : vector<16x128xf32>
    %c1_i32_13 = arith.constant 1 : i32
    %63 = tpu.dynamic_rotate %58 by %c1_i32_13 dim 0 : vector<16x128xf32>, i32 -> vector<16x128xf32>
    %cst_14 = arith.constant 0.000000e+00 : f32
    %64 = vector.shape_cast %51 : vector<16x1xi1> to vector<16x1xi1>
    %65 = vector.broadcast %64 : vector<16x1xi1> to vector<16x128xi1>
    %66 = vector.broadcast %cst_14 : f32 to vector<16x128xf32>
    %67 = arith.select %65, %63, %66 : vector<16x128xi1>, vector<16x128xf32>
    %c15_i32 = arith.constant 15 : i32
    %68 = tpu.dynamic_rotate %58 by %c15_i32 dim 0 : vector<16x128xf32>, i32 -> vector<16x128xf32>
    %cst_15 = arith.constant 0.000000e+00 : f32
    %69 = vector.shape_cast %53 : vector<16x1xi1> to vector<16x1xi1>
    %70 = vector.broadcast %69 : vector<16x1xi1> to vector<16x128xi1>
    %71 = vector.broadcast %cst_15 : f32 to vector<16x128xf32>
    %72 = arith.select %70, %68, %71 : vector<16x128xi1>, vector<16x128xf32>
    %c0_16 = arith.constant 0 : index
    %c0_17 = arith.constant 0 : index
    %c0_18 = arith.constant 0 : index
    %c0_19 = arith.constant 0 : index
    %73 = vector.load %arg4[%c0_16, %c0_17, %c0_18, %c0_19] : memref<1x32x16x128xf32, #tpu.memory_space<vmem>>, vector<1x1x16x128xf32>
    %74 = vector.shape_cast %73 : vector<1x1x16x128xf32> to vector<16x128xf32>
    %c1_i32_20 = arith.constant 1 : i32
    %75 = tpu.dynamic_rotate %74 by %c1_i32_20 dim 0 : vector<16x128xf32>, i32 -> vector<16x128xf32>
    %cst_21 = arith.constant 0.000000e+00 : f32
    %76 = vector.shape_cast %51 : vector<16x1xi1> to vector<16x1xi1>
    %77 = vector.broadcast %76 : vector<16x1xi1> to vector<16x128xi1>
    %78 = vector.broadcast %cst_21 : f32 to vector<16x128xf32>
    %79 = arith.select %77, %75, %78 : vector<16x128xi1>, vector<16x128xf32>
    %c15_i32_22 = arith.constant 15 : i32
    %80 = tpu.dynamic_rotate %74 by %c15_i32_22 dim 0 : vector<16x128xf32>, i32 -> vector<16x128xf32>
    %cst_23 = arith.constant 0.000000e+00 : f32
    %81 = vector.shape_cast %53 : vector<16x1xi1> to vector<16x1xi1>
    %82 = vector.broadcast %81 : vector<16x1xi1> to vector<16x128xi1>
    %83 = vector.broadcast %cst_23 : f32 to vector<16x128xf32>
    %84 = arith.select %82, %80, %83 : vector<16x128xi1>, vector<16x128xf32>
    %c0_i32_24 = arith.constant 0 : i32
    %c31_i32 = arith.constant 31 : i32
    %85 = arith.addi %c0_i32_24, %c31_i32 : i32
    %c1_i32_25 = arith.constant 1 : i32
    %86:6 = scf.for %arg9 = %c0_i32_24 to %85 step %c1_i32_25 iter_args(%arg10 = %58, %arg11 = %67, %arg12 = %72, %arg13 = %74, %arg14 = %79, %arg15 = %84) -> (vector<16x128xf32>, vector<16x128xf32>, vector<16x128xf32>, vector<16x128xf32>, vector<16x128xf32>, vector<16x128xf32>)  : i32 {
      %c1_i32_34 = arith.constant 1 : i32
      %118 = arith.addi %arg9, %c1_i32_34 : i32
      %c0_35 = arith.constant 0 : index
      %119 = arith.index_cast %118 : i32 to index
      %c0_36 = arith.constant 0 : index
      %c0_37 = arith.constant 0 : index
      %120 = vector.load %arg4[%c0_35, %119, %c0_36, %c0_37] : memref<1x32x16x128xf32, #tpu.memory_space<vmem>>, vector<1x1x16x128xf32>
      %121 = vector.shape_cast %120 : vector<1x1x16x128xf32> to vector<16x128xf32>
      %c1_i32_38 = arith.constant 1 : i32
      %122 = tpu.dynamic_rotate %121 by %c1_i32_38 dim 0 : vector<16x128xf32>, i32 -> vector<16x128xf32>
      %cst_39 = arith.constant 0.000000e+00 : f32
      %123 = vector.shape_cast %51 : vector<16x1xi1> to vector<16x1xi1>
      %124 = vector.broadcast %123 : vector<16x1xi1> to vector<16x128xi1>
      %125 = vector.broadcast %cst_39 : f32 to vector<16x128xf32>
      %126 = arith.select %124, %122, %125 : vector<16x128xi1>, vector<16x128xf32>
      %c15_i32_40 = arith.constant 15 : i32
      %127 = tpu.dynamic_rotate %121 by %c15_i32_40 dim 0 : vector<16x128xf32>, i32 -> vector<16x128xf32>
      %cst_41 = arith.constant 0.000000e+00 : f32
      %128 = vector.shape_cast %53 : vector<16x1xi1> to vector<16x1xi1>
      %129 = vector.broadcast %128 : vector<16x1xi1> to vector<16x128xi1>
      %130 = vector.broadcast %cst_41 : f32 to vector<16x128xf32>
      %131 = arith.select %129, %127, %130 : vector<16x128xi1>, vector<16x128xf32>
      %132 = arith.mulf %arg11, %5 : vector<16x128xf32>
      %133 = arith.addf %48, %132 : vector<16x128xf32>
      %134 = arith.mulf %arg10, %10 : vector<16x128xf32>
      %135 = arith.addf %133, %134 : vector<16x128xf32>
      %136 = arith.mulf %arg12, %15 : vector<16x128xf32>
      %137 = arith.addf %135, %136 : vector<16x128xf32>
      %138 = arith.mulf %arg14, %20 : vector<16x128xf32>
      %139 = arith.addf %137, %138 : vector<16x128xf32>
      %140 = arith.mulf %arg13, %25 : vector<16x128xf32>
      %141 = arith.addf %139, %140 : vector<16x128xf32>
      %142 = arith.mulf %arg15, %30 : vector<16x128xf32>
      %143 = arith.addf %141, %142 : vector<16x128xf32>
      %144 = arith.mulf %126, %35 : vector<16x128xf32>
      %145 = arith.addf %143, %144 : vector<16x128xf32>
      %146 = arith.mulf %121, %40 : vector<16x128xf32>
      %147 = arith.addf %145, %146 : vector<16x128xf32>
      %148 = arith.mulf %131, %45 : vector<16x128xf32>
      %149 = arith.addf %147, %148 : vector<16x128xf32>
      %c0_42 = arith.constant 0 : index
      %150 = arith.index_cast %arg9 : i32 to index
      %c0_43 = arith.constant 0 : index
      %c0_44 = arith.constant 0 : index
      %151 = vector.load %arg8[%c0_42, %150, %c0_43, %c0_44] : memref<1x32x16x128xf32, #tpu.memory_space<vmem>>, vector<1x1x16x128xf32>
      %152 = vector.shape_cast %151 : vector<1x1x16x128xf32> to vector<16x128xf32>
      %153 = vector.shape_cast %149 : vector<16x128xf32> to vector<1x1x16x128xf32>
      tpu.vector_store %arg8[%c0_42, %150, %c0_43, %c0_44], %153 {strides = array<i32>} : memref<1x32x16x128xf32, #tpu.memory_space<vmem>>, vector<1x1x16x128xf32>,
      scf.yield %arg13, %arg14, %arg15, %121, %126, %131 : vector<16x128xf32>, vector<16x128xf32>, vector<16x128xf32>, vector<16x128xf32>, vector<16x128xf32>, vector<16x128xf32>
    }
    %c31_i32_26 = arith.constant 31 : i32
    %c1_i32_27 = arith.constant 1 : i32
    %87 = tpu.dynamic_rotate %62 by %c1_i32_27 dim 0 : vector<16x128xf32>, i32 -> vector<16x128xf32>
    %cst_28 = arith.constant 0.000000e+00 : f32
    %88 = vector.shape_cast %51 : vector<16x1xi1> to vector<16x1xi1>
    %89 = vector.broadcast %88 : vector<16x1xi1> to vector<16x128xi1>
    %90 = vector.broadcast %cst_28 : f32 to vector<16x128xf32>
    %91 = arith.select %89, %87, %90 : vector<16x128xi1>, vector<16x128xf32>
    %c15_i32_29 = arith.constant 15 : i32
    %92 = tpu.dynamic_rotate %62 by %c15_i32_29 dim 0 : vector<16x128xf32>, i32 -> vector<16x128xf32>
    %cst_30 = arith.constant 0.000000e+00 : f32
    %93 = vector.shape_cast %53 : vector<16x1xi1> to vector<16x1xi1>
    %94 = vector.broadcast %93 : vector<16x1xi1> to vector<16x128xi1>
    %95 = vector.broadcast %cst_30 : f32 to vector<16x128xf32>
    %96 = arith.select %94, %92, %95 : vector<16x128xi1>, vector<16x128xf32>
    %97 = arith.mulf %86#1, %5 : vector<16x128xf32>
    %98 = arith.addf %48, %97 : vector<16x128xf32>
    %99 = arith.mulf %86#0, %10 : vector<16x128xf32>
    %100 = arith.addf %98, %99 : vector<16x128xf32>
    %101 = arith.mulf %86#2, %15 : vector<16x128xf32>
    %102 = arith.addf %100, %101 : vector<16x128xf32>
    %103 = arith.mulf %86#4, %20 : vector<16x128xf32>
    %104 = arith.addf %102, %103 : vector<16x128xf32>
    %105 = arith.mulf %86#3, %25 : vector<16x128xf32>
    %106 = arith.addf %104, %105 : vector<16x128xf32>
    %107 = arith.mulf %86#5, %30 : vector<16x128xf32>
    %108 = arith.addf %106, %107 : vector<16x128xf32>
    %109 = arith.mulf %91, %35 : vector<16x128xf32>
    %110 = arith.addf %108, %109 : vector<16x128xf32>
    %111 = arith.mulf %62, %40 : vector<16x128xf32>
    %112 = arith.addf %110, %111 : vector<16x128xf32>
    %113 = arith.mulf %96, %45 : vector<16x128xf32>
    %114 = arith.addf %112, %113 : vector<16x128xf32>
    %c0_31 = arith.constant 0 : index
    %c31 = arith.constant 31 : index
    %c0_32 = arith.constant 0 : index
    %c0_33 = arith.constant 0 : index
    %115 = vector.load %arg8[%c0_31, %c31, %c0_32, %c0_33] : memref<1x32x16x128xf32, #tpu.memory_space<vmem>>, vector<1x1x16x128xf32>
    %116 = vector.shape_cast %115 : vector<1x1x16x128xf32> to vector<16x128xf32>
    %117 = vector.shape_cast %114 : vector<16x128xf32> to vector<1x1x16x128xf32>
    tpu.vector_store %arg8[%c0_31, %c31, %c0_32, %c0_33], %117 {strides = array<i32>} : memref<1x32x16x128xf32, #tpu.memory_space<vmem>>, vector<1x1x16x128xf32>,
    return
  }
  func.func @transform_0(%arg0: i32, %arg1: i32, %arg2: i32) -> (i32, i32, i32, i32) {
    %c32_i32 = arith.constant 32 : i32
    %0 = arith.muli %arg1, %c32_i32 : i32
    %c1_i32 = arith.constant 1 : i32
    %1 = arith.subi %0, %c1_i32 : i32
    %c0_i32 = arith.constant 0 : i32
    %2 = arith.maxsi %1, %c0_i32 : i32
    %c0_i32_0 = arith.constant 0 : i32
    %c0_i32_1 = arith.constant 0 : i32
    return %arg0, %2, %c0_i32_0, %arg2 : i32, i32, i32, i32
  }
  func.func @transform_1(%arg0: i32, %arg1: i32, %arg2: i32) -> (i32, i32, i32, i32) {
    %c0_i32 = arith.constant 0 : i32
    %c0_i32_0 = arith.constant 0 : i32
    return %arg0, %arg1, %c0_i32, %arg2 : i32, i32, i32, i32
  }
  func.func @transform_2(%arg0: i32, %arg1: i32, %arg2: i32) -> (i32, i32, i32, i32) {
    %c1_i32 = arith.constant 1 : i32
    %0 = arith.addi %arg1, %c1_i32 : i32
    %c32_i32 = arith.constant 32 : i32
    %1 = arith.muli %0, %c32_i32 : i32
    %c31_i32 = arith.constant 31 : i32
    %2 = arith.minsi %1, %c31_i32 : i32
    %c0_i32 = arith.constant 0 : i32
    %c0_i32_0 = arith.constant 0 : i32
    return %arg0, %2, %c0_i32, %arg2 : i32, i32, i32, i32
  }
  func.func @transform_3(%arg0: i32, %arg1: i32, %arg2: i32) -> (i32, i32, i32) {
    %c0_i32 = arith.constant 0 : i32
    %c0_i32_0 = arith.constant 0 : i32
    %c0_i32_1 = arith.constant 0 : i32
    return %c0_i32, %c0_i32_0, %arg2 : i32, i32, i32
  }
  func.func @transform_4(%arg0: i32, %arg1: i32, %arg2: i32) -> (i32, i32) {
    %c0_i32 = arith.constant 0 : i32
    %c0_i32_0 = arith.constant 0 : i32
    return %c0_i32, %arg2 : i32, i32
  }
  func.func @transform_5(%arg0: i32, %arg1: i32, %arg2: i32) -> (i32, i32, i32, i32) {
    %c0_i32 = arith.constant 0 : i32
    %c0_i32_0 = arith.constant 0 : i32
    return %arg0, %arg1, %c0_i32, %arg2 : i32, i32, i32, i32
  }
}

</mosaic_0001>

<llo_original>
// kernel: tpu_custom_call.1
$region0: #{tpu_custom_call.1}
  #allocation0 [shape = 'u32[]', space=smem, size = 0x4, offset = 0x4, fixed_abs, tag = 'smem constant byte address 0x4 - core index']
  #allocation1 [shape = 'u32[144,128]{1,0:T(1,128)}', space=vmem, size = 0x12000, scoped, tag = 'internal scratch']
  %s0 = inlined_call_operand.hbm [shape: f32[2,32,16,128], index: 0, kind: input, shape index: {}]
  %s1 = inlined_call_operand.hbm [shape: f32[2,32,16,128], index: 1, kind: input, shape index: {}]
  %s2 = inlined_call_operand.hbm [shape: f32[2,32,16,128], index: 2, kind: input, shape index: {}]
  %s3 = inlined_call_operand.hbm [shape: f32[3,3,128], index: 3, kind: input, shape index: {}]
  %s4 = inlined_call_operand.vmem [shape: f32[1,128], index: 4, kind: input, shape index: {}]
  %s5 = inlined_call_operand.hbm [shape: f32[2,32,16,128], index: 5, kind: output, shape index: {}]
  %s6 = sld [smem:[#allocation0]]
  $region76: #{tpu_custom_call.1} parent=0
    _
  %s8 = ssub.s32 1, %s6
  %s9 = scalar_select 0, %s8, %s6
  $region1: #{tpu_custom_call.1} parent=0
    #allocation2 [shape = 'u8[16384]{0}', space=vmem, size = 0x4000, scoped, tag = 'input window, operand 0']
    #allocation3 [shape = 's32[2]{0}', space=sflag, size = 0x8, scoped, tag = 'scoped memory for tpu_custom_call.1']
    #allocation4 [shape = 's32[2]{0}', space=sflag, size = 0x8, scoped, tag = 'scoped memory for tpu_custom_call.1']
    #allocation5 [shape = 'u8[524288]{0}', space=vmem, size = 0x80000, scoped, tag = 'input window, operand 1']
    #allocation6 [shape = 's32[2]{0}', space=sflag, size = 0x8, scoped, tag = 'scoped memory for tpu_custom_call.1']
    #allocation7 [shape = 'u8[16384]{0}', space=vmem, size = 0x4000, scoped, tag = 'input window, operand 2']
    #allocation8 [shape = 'u8[6144]{0}', space=vmem, size = 0x1800, scoped, tag = 'input window, operand 3, single buffered']
    #allocation9 [shape = 's32[1]{0}', space=sflag, size = 0x4, scoped, tag = 'scoped memory for tpu_custom_call.1']
    #allocation10 [shape = 'u8[524288]{0}', space=vmem, size = 0x80000, scoped, tag = 'output window, operand 0']
    %10 = vsyncpa [#allocation3], 0
    %s11 = scalar_lea.sflag [#allocation3], 1
    %12 = vsyncpa %s11, 0
    %13 = vsyncpa [#allocation6], 0
    %s14 = scalar_lea.sflag [#allocation6], 1
    %15 = vsyncpa %s14, 0
    %16 = vsyncpa [#allocation9], 0
    %17 = vsyncpa [#allocation4], 0
    %s18 = scalar_lea.sflag [#allocation4], 1
    %19 = vsyncpa %s18, 0
    loop: start=0, step=1, limit=4
    $region2: #{tpu_custom_call.1} parent=1 // loop_pre_header
      _
    $region3: #{tpu_custom_call.1} parent=1 // loop_header
      %s21 = sphi 0, %s25
      %p22 = scmp.ge.s32.totalorder %s21, 4
      %s28 = sphi 0, %s47
      %s29 = sphi 0, %s43
      %s30 = sphi 0, %s39
      %s31 = sphi 0, %s28
      %s32 = sphi 0, %s29
      %s33 = sphi 0, %s30
      %s34 = sphi 0, %s31
      %s35 = sphi 0, %s32
      %s36 = sphi 0, %s33
      %s62 = sphi 0, %s64
      %s65 = sphi 0, %s62
      %s66 = sphi 0, %s65
      %s82 = sphi 0, %s66
      %s92 = sphi 0, %s94
      %s95 = sphi 0, %s92
      %s96 = sphi 0, %s95
      %s112 = sphi 0, %s96
      %s130 = sphi 0, %s132
      %s133 = sphi 0, %s130
      %s134 = sphi 0, %s133
      %s150 = sphi 0, %s134
      %s156 = sphi 0, %s158
      %s159 = sphi 0, %s156
      %s160 = sphi 0, %s159
      %s176 = sphi 0, %s160
      %s182 = sphi 0, %s184
      %s185 = sphi 0, %s182
      %s186 = sphi 0, %s185
      %s202 = sphi 0, %s186
      %s212 = sphi 0, %s214
      %s215 = sphi 0, %s212
      %s216 = sphi 0, %s215
      %s232 = sphi 0, %s216
    $region4: #{tpu_custom_call.1} parent=1 // loop_header_branch
      %24 = sbr.rel (%p22) target = $region8
    $region5: #{tpu_custom_call.1} parent=1 // loop_body
      %s26 = ssub.s32 %s21, 1
      %s27 = ssub.s32 %s21, 2
      %s37 = sadd.s32 1, %s30
      %p38 = scmp.ge.s32.totalorder %s37, 1
      %s39 = scalar_select %p38, 0, %s37
      %s40 = sadd.s32 1, %s29
      %s41 = scalar_select %p38, %s40, %s29
      %p42 = scmp.ge.s32.totalorder %s41, 1
      %s43 = scalar_select %p42, 0, %s41
      %s44 = sadd.s32 1, %s28
      %s45 = scalar_select %p42, %s44, %s28
      %p46 = scmp.ge.s32.totalorder %s45, 2
      %s47 = scalar_select %p46, 0, %s45
      %s48 = smul.u32 %s29, 32
      %s49 = ssub.s32 %s48, 1
      %p50 = scmp.gt.s32.totalorder %s49, 0
      %s51 = scalar_select %p50, %s49, 0
      %s52 = smul.u32 %s43, 32
      %s53 = ssub.s32 %s52, 1
      %p54 = scmp.gt.s32.totalorder %s53, 0
      %s55 = scalar_select %p54, %s53, 0
      %s56 = ssub.s32 %s28, %s47
      %s57 = ssub.s32 %s51, %s55
      %s58 = sor.u32 %s56, %s57
      %s59 = ssub.s32 %s30, %s39
      %s60 = sor.u32 %s58, %s59
      %p61 = scmp.eq.s32.totalorder %s60, 0
      %s63 = sadd.s32 %s62, 1
      %s64 = scalar_select %p61, %s62, %s63
      %p67 = pneg %p61
      %p68 = scmp.eq.s32.totalorder %s21, 1
      %p69 = por %p67, %p68
      %p70 = scmp.ne.s32.totalorder %s62, %s65
      %p71 = scmp.eq.s32.totalorder %s21, 0
      %p72 = por %p70, %p71
      %p73 = scmp.ne.s32.totalorder %s62, %s65
      %p74 = scmp.eq.s32.totalorder %s26, 1
      %p75 = por %p73, %p74
      %p76 = scmp.ne.s32.totalorder %s65, %s66
      %p77 = scmp.eq.s32.totalorder %s26, 0
      %p78 = por %p76, %p77
      %p79 = scmp.ne.s32.totalorder %s65, %s66
      %p80 = scmp.eq.s32.totalorder %s27, 1
      %p81 = por %p79, %p80
      %p83 = scmp.ne.s32.totalorder %s66, %s82
      %p84 = scmp.eq.s32.totalorder %s27, 0
      %p85 = por %p83, %p84
      %s86 = ssub.s32 %s28, %s47
      %s87 = ssub.s32 %s29, %s43
      %s88 = sor.u32 %s86, %s87
      %s89 = ssub.s32 %s30, %s39
      %s90 = sor.u32 %s88, %s89
      %p91 = scmp.eq.s32.totalorder %s90, 0
      %s93 = sadd.s32 %s92, 1
      %s94 = scalar_select %p91, %s92, %s93
      %p97 = pneg %p91
      %p98 = scmp.eq.s32.totalorder %s21, 1
      %p99 = por %p97, %p98
      %p100 = scmp.ne.s32.totalorder %s92, %s95
      %p101 = scmp.eq.s32.totalorder %s21, 0
      %p102 = por %p100, %p101
      %p103 = scmp.ne.s32.totalorder %s92, %s95
      %p104 = scmp.eq.s32.totalorder %s26, 1
      %p105 = por %p103, %p104
      %p106 = scmp.ne.s32.totalorder %s95, %s96
      %p107 = scmp.eq.s32.totalorder %s26, 0
      %p108 = por %p106, %p107
      %p109 = scmp.ne.s32.totalorder %s95, %s96
      %p110 = scmp.eq.s32.totalorder %s27, 1
      %p111 = por %p109, %p110
      %p113 = scmp.ne.s32.totalorder %s96, %s112
      %p114 = scmp.eq.s32.totalorder %s27, 0
      %p115 = por %p113, %p114
      %s116 = sadd.s32 %s29, 1
      %s117 = smul.u32 %s116, 32
      %p118 = scmp.lt.s32.totalorder %s117, 31
      %s119 = scalar_select %p118, %s117, 31
      %s120 = sadd.s32 %s43, 1
      %s121 = smul.u32 %s120, 32
      %p122 = scmp.lt.s32.totalorder %s121, 31
      %s123 = scalar_select %p122, %s121, 31
      %s124 = ssub.s32 %s28, %s47
      %s125 = ssub.s32 %s119, %s123
      %s126 = sor.u32 %s124, %s125
      %s127 = ssub.s32 %s30, %s39
      %s128 = sor.u32 %s126, %s127
      %p129 = scmp.eq.s32.totalorder %s128, 0
      %s131 = sadd.s32 %s130, 1
      %s132 = scalar_select %p129, %s130, %s131
      %p135 = pneg %p129
      %p136 = scmp.eq.s32.totalorder %s21, 1
      %p137 = por %p135, %p136
      %p138 = scmp.ne.s32.totalorder %s130, %s133
      %p139 = scmp.eq.s32.totalorder %s21, 0
      %p140 = por %p138, %p139
      %p141 = scmp.ne.s32.totalorder %s130, %s133
      %p142 = scmp.eq.s32.totalorder %s26, 1
      %p143 = por %p141, %p142
      %p144 = scmp.ne.s32.totalorder %s133, %s134
      %p145 = scmp.eq.s32.totalorder %s26, 0
      %p146 = por %p144, %p145
      %p147 = scmp.ne.s32.totalorder %s133, %s134
      %p148 = scmp.eq.s32.totalorder %s27, 1
      %p149 = por %p147, %p148
      %p151 = scmp.ne.s32.totalorder %s134, %s150
      %p152 = scmp.eq.s32.totalorder %s27, 0
      %p153 = por %p151, %p152
      %s154 = ssub.s32 %s30, %s39
      %p155 = scmp.eq.s32.totalorder %s154, 0
      %s157 = sadd.s32 %s156, 1
      %s158 = scalar_select %p155, %s156, %s157
      %p161 = pneg %p155
      %p162 = scmp.eq.s32.totalorder %s21, 1
      %p163 = por %p161, %p162
      %p164 = scmp.ne.s32.totalorder %s156, %s159
      %p165 = scmp.eq.s32.totalorder %s21, 0
      %p166 = por %p164, %p165
      %p167 = scmp.ne.s32.totalorder %s156, %s159
      %p168 = scmp.eq.s32.totalorder %s26, 1
      %p169 = por %p167, %p168
      %p170 = scmp.ne.s32.totalorder %s159, %s160
      %p171 = scmp.eq.s32.totalorder %s26, 0
      %p172 = por %p170, %p171
      %p173 = scmp.ne.s32.totalorder %s159, %s160
      %p174 = scmp.eq.s32.totalorder %s27, 1
      %p175 = por %p173, %p174
      %p177 = scmp.ne.s32.totalorder %s160, %s176
      %p178 = scmp.eq.s32.totalorder %s27, 0
      %p179 = por %p177, %p178
      %s180 = ssub.s32 %s30, %s39
      %p181 = scmp.eq.s32.totalorder %s180, 0
      %s183 = sadd.s32 %s182, 1
      %s184 = scalar_select %p181, %s182, %s183
      %p187 = pneg %p181
      %p188 = scmp.eq.s32.totalorder %s21, 1
      %p189 = por %p187, %p188
      %p190 = scmp.ne.s32.totalorder %s182, %s185
      %p191 = scmp.eq.s32.totalorder %s21, 0
      %p192 = por %p190, %p191
      %p193 = scmp.ne.s32.totalorder %s182, %s185
      %p194 = scmp.eq.s32.totalorder %s26, 1
      %p195 = por %p193, %p194
      %p196 = scmp.ne.s32.totalorder %s185, %s186
      %p197 = scmp.eq.s32.totalorder %s26, 0
      %p198 = por %p196, %p197
      %p199 = scmp.ne.s32.totalorder %s185, %s186
      %p200 = scmp.eq.s32.totalorder %s27, 1
      %p201 = por %p199, %p200
      %p203 = scmp.ne.s32.totalorder %s186, %s202
      %p204 = scmp.eq.s32.totalorder %s27, 0
      %p205 = por %p203, %p204
      %s206 = ssub.s32 %s28, %s47
      %s207 = ssub.s32 %s29, %s43
      %s208 = sor.u32 %s206, %s207
      %s209 = ssub.s32 %s30, %s39
      %s210 = sor.u32 %s208, %s209
      %p211 = scmp.eq.s32.totalorder %s210, 0
      %s213 = sadd.s32 %s212, 1
      %s214 = scalar_select %p211, %s212, %s213
      %p217 = pneg %p211
      %p218 = scmp.eq.s32.totalorder %s21, 1
      %p219 = por %p217, %p218
      %p220 = scmp.ne.s32.totalorder %s212, %s215
      %p221 = scmp.eq.s32.totalorder %s21, 0
      %p222 = por %p220, %p221
      %p223 = scmp.ne.s32.totalorder %s212, %s215
      %p224 = scmp.eq.s32.totalorder %s26, 1
      %p225 = por %p223, %p224
      %p226 = scmp.ne.s32.totalorder %s215, %s216
      %p227 = scmp.eq.s32.totalorder %s26, 0
      %p228 = por %p226, %p227
      %p229 = scmp.ne.s32.totalorder %s215, %s216
      %p230 = scmp.eq.s32.totalorder %s27, 1
      %p231 = por %p229, %p230
      %p233 = scmp.ne.s32.totalorder %s216, %s232
      %p234 = scmp.eq.s32.totalorder %s27, 0
      %p235 = por %p233, %p234
      %p236 = scmp.le.s32.totalorder 1, %s21
      %p237 = scmp.lt.s32.totalorder %s21, 3
      %p238 = pnand %p236, %p237
      %p239 = pneg %p238
      // Predicated region
      $region9: #{tpu_custom_call.1} parent=5 // pred_check
        _
      $region10: #{tpu_custom_call.1} parent=5 // pred_check_branch
        %241 = sbr.rel (%p238) target = $region12
      $region11: #{tpu_custom_call.1} parent=5 // pred_region
        %s242 = ssub.s32 %s21, 1
        // Predicated region
        $region13: #{tpu_custom_call.1} parent=11 // pred_check
          %p243 = pneg %p172
        $region14: #{tpu_custom_call.1} parent=11 // pred_check_branch
          %245 = sbr.rel (%p243) target = $region16
        $region15: #{tpu_custom_call.1} parent=11 // pred_region
          %s247 = ssub.s32 192, 192
          %248 = vsyncadd [#allocation9], %s247
          %s249 = smul.addr %s33, 64
          %s250 = scalar_lea.hbm %s3, %s249
          %s251 = sshll.u32 [#allocation8], 4
          %s252 = int_to_ptr.vmem [resolvable:$true] %s251
          %257 = dma.hbm_to_vmem [thread:$0]  %s250, 192, %s252, [#allocation9], 64, 64, 4
        $region16: #{tpu_custom_call.1} parent=11 // pred_fallthru
          _
        // Predicated region
        $region17: #{tpu_custom_call.1} parent=11 // pred_check
          %p258 = pneg %p198
        $region18: #{tpu_custom_call.1} parent=11 // pred_check_branch
          %260 = sbr.rel (%p258) target = $region20
        $region19: #{tpu_custom_call.1} parent=11 // pred_region
          %p261 = scmp.lt.s32.totalorder %s33, 0
          %s262 = scalar_select %p261, %s33, 0
          %s263 = scalar_lea.vmem %s4, %s262
        $region20: #{tpu_custom_call.1} parent=11 // pred_fallthru
          _
      $region12: #{tpu_custom_call.1} parent=5 // pred_fallthru
        _
      %p264 = scmp.lt.s32.totalorder %s21, 2
      // Predicated region
      $region21: #{tpu_custom_call.1} parent=5 // pred_check
        %p265 = pneg %p264
      $region22: #{tpu_custom_call.1} parent=5 // pred_check_branch
        %267 = sbr.rel (%p265) target = $region24
      $region23: #{tpu_custom_call.1} parent=5 // pred_region
        // Predicated region
        $region25: #{tpu_custom_call.1} parent=23 // pred_check
          %p268 = pneg %p72
        $region26: #{tpu_custom_call.1} parent=23 // pred_check_branch
          %270 = sbr.rel (%p268) target = $region28
        $region27: #{tpu_custom_call.1} parent=23 // pred_region
          %s271 = sand.u32 %s62, 1
          %s272 = scalar_lea.sflag [#allocation3], %s271
          %s273 = sand.u32 %s62, 1
          %s274 = smul.addr %s273, 16
          %s275 = scalar_lea.vmem [#allocation2], %s274
          %s276 = smul.u32 %s29, 32
          %s277 = ssub.s32 %s276, 1
          %p278 = scmp.gt.s32.totalorder %s277, 0
          %s279 = scalar_select %p278, %s277, 0
          %s281 = ssub.s32 256, 256
          %282 = vsyncadd %s272, %s281
          %s283 = smul.addr %s279, 2
          %s284 = sadd.s32 %s30, %s283
          %s285 = smul.addr %s28, 64
          %s286 = sadd.s32 %s284, %s285
          %s287 = smul.addr %s286, 128
          %s288 = scalar_lea.hbm %s0, %s287
          %s289 = sshll.u32 %s275, 4
          %s290 = int_to_ptr.vmem [resolvable:$true] %s289
          %295 = dma.hbm_to_vmem [thread:$0]  %s288, 256, %s290, %s272, 128, 128, 8
        $region28: #{tpu_custom_call.1} parent=23 // pred_fallthru
          _
        // Predicated region
        $region29: #{tpu_custom_call.1} parent=23 // pred_check
          %p296 = pneg %p102
        $region30: #{tpu_custom_call.1} parent=23 // pred_check_branch
          %298 = sbr.rel (%p296) target = $region32
        $region31: #{tpu_custom_call.1} parent=23 // pred_region
          %s299 = sand.u32 %s21, 1
          %s300 = scalar_lea.sflag [#allocation6], %s299
          %s301 = sand.u32 %s92, 1
          %s302 = smul.addr %s301, 512
          %s303 = scalar_lea.vmem [#allocation5], %s302
          %s304 = smul.u32 32, %s29
          %s306 = ssub.s32 8192, 8192
          %307 = vsyncadd %s300, %s306
          %s308 = smul.addr %s304, 2
          %s309 = sadd.s32 %s30, %s308
          %s310 = smul.addr %s28, 64
          %s311 = sadd.s32 %s309, %s310
          %s312 = smul.addr %s311, 128
          %s313 = scalar_lea.hbm %s1, %s312
          %s314 = sshll.u32 %s303, 4
          %s315 = int_to_ptr.vmem [resolvable:$true] %s314
          %320 = dma.hbm_to_vmem [thread:$0]  %s313, 8192, %s315, %s300, 128, 128, 8
        $region32: #{tpu_custom_call.1} parent=23 // pred_fallthru
          _
        // Predicated region
        $region33: #{tpu_custom_call.1} parent=23 // pred_check
          %p321 = pneg %p140
        $region34: #{tpu_custom_call.1} parent=23 // pred_check_branch
          %323 = sbr.rel (%p321) target = $region36
        $region35: #{tpu_custom_call.1} parent=23 // pred_region
          %s324 = sand.u32 %s21, 1
          %s325 = scalar_lea.sflag [#allocation6], %s324
          %s326 = sand.u32 %s130, 1
          %s327 = smul.addr %s326, 16
          %s328 = scalar_lea.vmem [#allocation7], %s327
          %s329 = sadd.s32 %s29, 1
          %s330 = smul.u32 %s329, 32
          %p331 = scmp.lt.s32.totalorder %s330, 31
          %s332 = scalar_select %p331, %s330, 31
          %s334 = ssub.s32 256, 256
          %335 = vsyncadd %s325, %s334
          %s336 = smul.addr %s332, 2
          %s337 = sadd.s32 %s30, %s336
          %s338 = smul.addr %s28, 64
          %s339 = sadd.s32 %s337, %s338
          %s340 = smul.addr %s339, 128
          %s341 = scalar_lea.hbm %s2, %s340
          %s342 = sshll.u32 %s328, 4
          %s343 = int_to_ptr.vmem [resolvable:$true] %s342
          %348 = dma.hbm_to_vmem [thread:$0]  %s341, 256, %s343, %s325, 128, 128, 8
        $region36: #{tpu_custom_call.1} parent=23 // pred_fallthru
          _
      $region24: #{tpu_custom_call.1} parent=5 // pred_fallthru
        _
      %p349 = scmp.le.s32.totalorder 1, %s21
      %p350 = scmp.lt.s32.totalorder %s21, 3
      %p351 = pnand %p349, %p350
      %p352 = pneg %p351
      // Predicated region
      $region37: #{tpu_custom_call.1} parent=5 // pred_check
        _
      $region38: #{tpu_custom_call.1} parent=5 // pred_check_branch
        %354 = sbr.rel (%p351) target = $region40
      $region39: #{tpu_custom_call.1} parent=5 // pred_region
        %s355 = ssub.s32 %s21, 1
        %s356 = sand.u32 %s65, 1
        %s357 = scalar_lea.sflag [#allocation3], %s356
        %s358 = sand.u32 %s65, 1
        %s359 = smul.addr %s358, 16
        %s360 = scalar_lea.vmem [#allocation2], %s359
        // Predicated region
        $region41: #{tpu_custom_call.1} parent=39 // pred_check
          %p361 = pneg %p78
        $region42: #{tpu_custom_call.1} parent=39 // pred_check_branch
          %363 = sbr.rel (%p361) target = $region44
        $region43: #{tpu_custom_call.1} parent=39 // pred_region
          %364 = dma.done %s357, 256
        $region44: #{tpu_custom_call.1} parent=39 // pred_fallthru
          _
        %s365 = sand.u32 %s26, 1
        %s366 = scalar_lea.sflag [#allocation6], %s365
        %s367 = sand.u32 %s95, 1
        %s368 = smul.addr %s367, 512
        %s369 = scalar_lea.vmem [#allocation5], %s368
        // Predicated region
        $region45: #{tpu_custom_call.1} parent=39 // pred_check
          %p370 = pneg %p108
        $region46: #{tpu_custom_call.1} parent=39 // pred_check_branch
          %372 = sbr.rel (%p370) target = $region48
        $region47: #{tpu_custom_call.1} parent=39 // pred_region
          %373 = dma.done %s366, 8192
        $region48: #{tpu_custom_call.1} parent=39 // pred_fallthru
          _
        %s374 = sand.u32 %s26, 1
        %s375 = scalar_lea.sflag [#allocation6], %s374
        %s376 = sand.u32 %s133, 1
        %s377 = smul.addr %s376, 16
        %s378 = scalar_lea.vmem [#allocation7], %s377
        // Predicated region
        $region49: #{tpu_custom_call.1} parent=39 // pred_check
          %p379 = pneg %p146
        $region50: #{tpu_custom_call.1} parent=39 // pred_check_branch
          %381 = sbr.rel (%p379) target = $region52
        $region51: #{tpu_custom_call.1} parent=39 // pred_region
          %382 = dma.done %s375, 256
        $region52: #{tpu_custom_call.1} parent=39 // pred_fallthru
          _
        // Predicated region
        $region53: #{tpu_custom_call.1} parent=39 // pred_check
          %p383 = pneg %p172
        $region54: #{tpu_custom_call.1} parent=39 // pred_check_branch
          %385 = sbr.rel (%p383) target = $region56
        $region55: #{tpu_custom_call.1} parent=39 // pred_region
          %386 = dma.done [#allocation9], 192
        $region56: #{tpu_custom_call.1} parent=39 // pred_fallthru
          _
        %s387 = sand.u32 %s65, 1
        %s388 = scalar_lea.sflag [#allocation3], %s387
        %s389 = sand.u32 %s65, 1
        %s390 = smul.addr %s389, 16
        %s391 = scalar_lea.vmem [#allocation2], %s390
        %p392 = pneg %p78
        %p393 = pneg %p75
        %s394 = sand.u32 %s26, 1
        %s395 = scalar_lea.sflag [#allocation6], %s394
        %s396 = sand.u32 %s95, 1
        %s397 = smul.addr %s396, 512
        %s398 = scalar_lea.vmem [#allocation5], %s397
        %p399 = pneg %p108
        %p400 = pneg %p105
        %s401 = sand.u32 %s26, 1
        %s402 = scalar_lea.sflag [#allocation6], %s401
        %s403 = sand.u32 %s133, 1
        %s404 = smul.addr %s403, 16
        %s405 = scalar_lea.vmem [#allocation7], %s404
        %p406 = pneg %p146
        %p407 = pneg %p143
        %p408 = pneg %p172
        %p409 = pneg %p169
        %p410 = scmp.lt.s32.totalorder %s33, 0
        %s411 = scalar_select %p410, %s33, 0
        %s412 = scalar_lea.vmem %s4, %s411
        %p413 = pneg %p198
        %p414 = pneg %p195
        %p415 = pneg %p228
        %p416 = pneg %p225
        %s417 = sand.u32 %s215, 1
        %s418 = scalar_lea.sflag [#allocation4], %s417
        %s419 = sand.u32 %s215, 1
        %s420 = smul.addr %s419, 512
        %s421 = scalar_lea.vmem [#allocation10], %s420
        %s422 = smul.u32 %s32, 32
        %s423 = ssub.s32 %s422, 1
        %p424 = scmp.gt.s32.totalorder %s423, 0
        %s425 = scalar_select %p424, %s423, 0
        %s426 = smul.u32 32, %s32
        %s427 = sadd.s32 %s32, 1
        %s428 = smul.u32 %s427, 32
        %p429 = scmp.lt.s32.totalorder %s428, 31
        %s430 = scalar_select %p429, %s428, 31
        %p431 = scmp.lt.s32.totalorder %s33, 0
        %s432 = scalar_select %p431, %s33, 0
        %s433 = scalar_lea.vmem %s4, %s432
        %s434 = smul.u32 32, %s32
        %v435 = vld [vmem:[#allocation8] sm:$0x7]
        %v436 = vld [vmem:[#allocation8 + $0x4] sm:$0x7]
        %v437 = vld [vmem:[#allocation8 + $0x8] sm:$0x7]
        %v438 = vlaneseq
        %v439 = vshrl.u32 %v438, 7
        %v440 = vsub.s32 0, %v439
        %v441 = vrot.slane %v435, %v440
        %v442 = vlaneseq
        %v443 = vshrl.u32 %v442, 7
        %v444 = vsub.s32 1, %v443
        %v445 = vrot.slane %v435, %v444
        %v446 = vlaneseq
        %v447 = vshrl.u32 %v446, 7
        %v448 = vsub.s32 2, %v447
        %v449 = vrot.slane %v435, %v448
        %v450 = vlaneseq
        %v451 = vshrl.u32 %v450, 7
        %v452 = vsub.s32 0, %v451
        %v453 = vrot.slane %v436, %v452
        %v454 = vlaneseq
        %v455 = vshrl.u32 %v454, 7
        %v456 = vsub.s32 1, %v455
        %v457 = vrot.slane %v436, %v456
        %v458 = vlaneseq
        %v459 = vshrl.u32 %v458, 7
        %v460 = vsub.s32 2, %v459
        %v461 = vrot.slane %v436, %v460
        %v462 = vlaneseq
        %v463 = vshrl.u32 %v462, 7
        %v464 = vsub.s32 0, %v463
        %v465 = vrot.slane %v437, %v464
        %v466 = vlaneseq
        %v467 = vshrl.u32 %v466, 7
        %v468 = vsub.s32 1, %v467
        %v469 = vrot.slane %v437, %v468
        %v470 = vlaneseq
        %v471 = vshrl.u32 %v470, 7
        %v472 = vsub.s32 2, %v471
        %v473 = vrot.slane %v437, %v472
        %v474 = vld [vmem:[%s433] sm:$0x1]
        %v476 = vlaneseq
        %v477 = vshrl.u32 %v476, 7
        %v478 = vsub.s32 0, %v477
        %v479 = vrot.slane %v474, %v478
        %v481 = vlaneseq
        %v482 = vshrl.u32 %v481, 7
        %v483 = vadd.s32 %v482, 8
        %vm484 = vcmp.ge.s32.totalorder %v482, 1
        %vm485 = vcmp.ge.s32.totalorder %v483, 1
        %vm486 = vcmp.le.s32.totalorder %v482, 14
        %vm487 = vcmp.le.s32.totalorder %v483, 14
        %p488 = scmp.gt.s32.totalorder %s32, 0
        %v489 = vld [vmem:[%s360] sm:$0xff]
        %v490 = vld [vmem:[%s360 + $0x8] sm:$0xff]
        %s491 = scalar_select %p488, 1, 0
        %v492 = vstv %s491
        %vm493 = vcmp.eq.s32.totalorder %v492, 1
        %v494 = vsel %vm493, %v489, 0.0
        %v495 = vsel %vm493, %v490, 0.0
        %p496 = scmp.lt.s32.totalorder %s32, 0
        %v497 = vld [vmem:[%s378] sm:$0xff]
        %v498 = vld [vmem:[%s378 + $0x8] sm:$0xff]
        %s499 = scalar_select %p496, 1, 0
        %v500 = vstv %s499
        %vm501 = vcmp.eq.s32.totalorder %v500, 1
        %v502 = vsel %vm501, %v497, 0.0
        %v503 = vsel %vm501, %v498, 0.0
        %v504 = vrot.slane %v494, 7
        %v505 = vrot.slane %v495, 7
        %vm506 = vcmp.lt.s32.totalorder %v482, 1
        %v507 = vsel %vm506, %v504, %v505
        %v508 = vsel %vm506, %v505, %v504
        %v509 = vsel %vm484, 1, 0
        %v510 = vsel %vm485, 1, 0
        %vm511 = vcmp.eq.s32.totalorder %v509, 1
        %vm512 = vcmp.eq.s32.totalorder %v510, 1
        %v513 = vsel %vm511, %v508, 0.0
        %v514 = vsel %vm512, %v507, 0.0
        %v515 = vrot.slane %v494, 1
        %v516 = vrot.slane %v495, 1
        %vm517 = vcmp.lt.s32.totalorder %v482, 7
        %v518 = vsel %vm517, %v515, %v516
        %v519 = vsel %vm517, %v516, %v515
        %v520 = vsel %vm486, 1, 0
        %v521 = vsel %vm487, 1, 0
        %vm522 = vcmp.eq.s32.totalorder %v520, 1
        %vm523 = vcmp.eq.s32.totalorder %v521, 1
        %v524 = vsel %vm522, %v518, 0.0
        %v525 = vsel %vm523, %v519, 0.0
        %v526 = vld [vmem:[%s369] sm:$0xff]
        %v527 = vld [vmem:[%s369 + $0x8] sm:$0xff]
        %v528 = vrot.slane %v526, 7
        %v529 = vrot.slane %v527, 7
        %v530 = vsel %vm506, %v528, %v529
        %v531 = vsel %vm506, %v529, %v528
        %v532 = vsel %vm511, %v531, 0.0
        %v533 = vsel %vm512, %v530, 0.0
        %v534 = vrot.slane %v526, 1
        %v535 = vrot.slane %v527, 1
        %v536 = vsel %vm517, %v534, %v535
        %v537 = vsel %vm517, %v535, %v534
        %v538 = vsel %vm522, %v536, 0.0
        %v539 = vsel %vm523, %v537, 0.0
        loop: start=0, step=1, limit=31
        $region57: #{tpu_custom_call.1} parent=39 // loop_pre_header
          _
        $region58: #{tpu_custom_call.1} parent=39 // loop_header
          %s541 = sphi 0, %s545
          %p542 = scmp.ge.s32.totalorder %s541, 31
          %v546 = vphi %v494, %v552
          %v547 = vphi %v495, %v553
          %v548 = vphi %v513, %v554
          %v549 = vphi %v514, %v555
          %v550 = vphi %v524, %v556
          %v551 = vphi %v525, %v557
          %v552 = vphi %v526, %v561
          %v553 = vphi %v527, %v562
          %v554 = vphi %v532, %v567
          %v555 = vphi %v533, %v568
          %v556 = vphi %v538, %v573
          %v557 = vphi %v539, %v574
        $region59: #{tpu_custom_call.1} parent=39 // loop_header_branch
          %544 = sbr.rel (%p542) target = $region63
        $region60: #{tpu_custom_call.1} parent=39 // loop_body
          %s558 = sadd.s32 %s541, 1
          %s559 = smul.u32 %s558, 16
          %s560 = scalar_lea.vmem %s369, %s559 [#allocation5]
          %v561 = vld [vmem:[%s560] sm:$0xff]
          %v562 = vld [vmem:[%s560 + $0x8] sm:$0xff]
          %v563 = vrot.slane %v561, 7
          %v564 = vrot.slane %v562, 7
          %v565 = vsel %vm506, %v563, %v564
          %v566 = vsel %vm506, %v564, %v563
          %v567 = vsel %vm511, %v566, 0.0
          %v568 = vsel %vm512, %v565, 0.0
          %v569 = vrot.slane %v561, 1
          %v570 = vrot.slane %v562, 1
          %v571 = vsel %vm517, %v569, %v570
          %v572 = vsel %vm517, %v570, %v569
          %v573 = vsel %vm522, %v571, 0.0
          %v574 = vsel %vm523, %v572, 0.0
          %v575 = vmul.f32 %v548, %v441
          %v576 = vmul.f32 %v549, %v441
          %v577 = vadd.f32 %v479, %v575
          %v578 = vadd.f32 %v479, %v576
          %v579 = vmul.f32 %v546, %v445
          %v580 = vmul.f32 %v547, %v445
          %v581 = vadd.f32 %v577, %v579
          %v582 = vadd.f32 %v578, %v580
          %v583 = vmul.f32 %v550, %v449
          %v584 = vmul.f32 %v551, %v449
          %v585 = vadd.f32 %v581, %v583
          %v586 = vadd.f32 %v582, %v584
          %v587 = vmul.f32 %v554, %v453
          %v588 = vmul.f32 %v555, %v453
          %v589 = vadd.f32 %v585, %v587
          %v590 = vadd.f32 %v586, %v588
          %v591 = vmul.f32 %v552, %v457
          %v592 = vmul.f32 %v553, %v457
          %v593 = vadd.f32 %v589, %v591
          %v594 = vadd.f32 %v590, %v592
          %v595 = vmul.f32 %v556, %v461
          %v596 = vmul.f32 %v557, %v461
          %v597 = vadd.f32 %v593, %v595
          %v598 = vadd.f32 %v594, %v596
          %v599 = vmul.f32 %v567, %v465
          %v600 = vmul.f32 %v568, %v465
          %v601 = vadd.f32 %v597, %v599
          %v602 = vadd.f32 %v598, %v600
          %v603 = vmul.f32 %v561, %v469
          %v604 = vmul.f32 %v562, %v469
          %v605 = vadd.f32 %v601, %v603
          %v606 = vadd.f32 %v602, %v604
          %v607 = vmul.f32 %v573, %v473
          %v608 = vmul.f32 %v574, %v473
          %v609 = vadd.f32 %v605, %v607
          %v610 = vadd.f32 %v606, %v608
          %s611 = smul.u32 %s541, 16
          %s612 = scalar_lea.vmem %s421, %s611 [#allocation10]
          %613 = vst [vmem:[%s612] sm:$0xff] %v609
          %614 = vst [vmem:[%s612 + $0x8] sm:$0xff] %v610
        $region61: #{tpu_custom_call.1} parent=39 // loop_footer
          %s545 = sadd.s32 1, %s541
        $region62: #{tpu_custom_call.1} parent=39 // loop_footer_branch
          %540 = sbr.rel target = $region58
        $region63: #{tpu_custom_call.1} parent=39 // loop_exit
          _
        %v615 = vrot.slane %v502, 7
        %v616 = vrot.slane %v503, 7
        %v617 = vsel %vm506, %v615, %v616
        %v618 = vsel %vm506, %v616, %v615
        %v619 = vsel %vm511, %v618, 0.0
        %v620 = vsel %vm512, %v617, 0.0
        %v621 = vrot.slane %v502, 1
        %v622 = vrot.slane %v503, 1
        %v623 = vsel %vm517, %v621, %v622
        %v624 = vsel %vm517, %v622, %v621
        %v625 = vsel %vm522, %v623, 0.0
        %v626 = vsel %vm523, %v624, 0.0
        %v627 = vmul.f32 %v548, %v441
        %v628 = vmul.f32 %v549, %v441
        %v629 = vadd.f32 %v479, %v627
        %v630 = vadd.f32 %v479, %v628
        %v631 = vmul.f32 %v546, %v445
        %v632 = vmul.f32 %v547, %v445
        %v633 = vadd.f32 %v629, %v631
        %v634 = vadd.f32 %v630, %v632
        %v635 = vmul.f32 %v550, %v449
        %v636 = vmul.f32 %v551, %v449
        %v637 = vadd.f32 %v633, %v635
        %v638 = vadd.f32 %v634, %v636
        %v639 = vmul.f32 %v554, %v453
        %v640 = vmul.f32 %v555, %v453
        %v641 = vadd.f32 %v637, %v639
        %v642 = vadd.f32 %v638, %v640
        %v643 = vmul.f32 %v552, %v457
        %v644 = vmul.f32 %v553, %v457
        %v645 = vadd.f32 %v641, %v643
        %v646 = vadd.f32 %v642, %v644
        %v647 = vmul.f32 %v556, %v461
        %v648 = vmul.f32 %v557, %v461
        %v649 = vadd.f32 %v645, %v647
        %v650 = vadd.f32 %v646, %v648
        %v651 = vmul.f32 %v619, %v465
        %v652 = vmul.f32 %v620, %v465
        %v653 = vadd.f32 %v649, %v651
        %v654 = vadd.f32 %v650, %v652
        %v655 = vmul.f32 %v502, %v469
        %v656 = vmul.f32 %v503, %v469
        %v657 = vadd.f32 %v653, %v655
        %v658 = vadd.f32 %v654, %v656
        %v659 = vmul.f32 %v625, %v473
        %v660 = vmul.f32 %v626, %v473
        %v661 = vadd.f32 %v657, %v659
        %v662 = vadd.f32 %v658, %v660
        %s663 = scalar_lea.vmem %s421, 496 [#allocation10]
        %664 = vst [vmem:[%s663] sm:$0xff] %v661
        %665 = vst [vmem:[%s663 + $0x8] sm:$0xff] %v662
        %s666 = sand.u32 %s215, 1
        %s667 = scalar_lea.sflag [#allocation4], %s666
        %s668 = sand.u32 %s215, 1
        %s669 = smul.addr %s668, 512
        %s670 = scalar_lea.vmem [#allocation10], %s669
        // Predicated region
        $region64: #{tpu_custom_call.1} parent=39 // pred_check
          %p671 = pneg %p225
        $region65: #{tpu_custom_call.1} parent=39 // pred_check_branch
          %673 = sbr.rel (%p671) target = $region67
        $region66: #{tpu_custom_call.1} parent=39 // pred_region
          %s674 = smul.u32 32, %s32
          %s676 = ssub.s32 8192, 8192
          %677 = vsyncadd %s667, %s676
          %s678 = smul.addr %s674, 2
          %s679 = sadd.s32 %s33, %s678
          %s680 = smul.addr %s31, 64
          %s681 = sadd.s32 %s679, %s680
          %s682 = smul.addr %s681, 128
          %s683 = scalar_lea.hbm %s5, %s682
          %s684 = sshll.u32 %s670, 4
          %s685 = int_to_ptr.vmem [resolvable:$true] %s684
          %690 = dma.vmem_to_hbm [thread:$0]  %s685, 8192, %s683, %s667, 128, 128, 8
        $region67: #{tpu_custom_call.1} parent=39 // pred_fallthru
          _
      $region40: #{tpu_custom_call.1} parent=5 // pred_fallthru
        _
      %p691 = scmp.le.s32.totalorder 2, %s21
      // Predicated region
      $region68: #{tpu_custom_call.1} parent=5 // pred_check
        %p692 = pneg %p691
      $region69: #{tpu_custom_call.1} parent=5 // pred_check_branch
        %694 = sbr.rel (%p692) target = $region71
      $region70: #{tpu_custom_call.1} parent=5 // pred_region
        %s695 = ssub.s32 %s21, 2
        // Predicated region
        $region72: #{tpu_custom_call.1} parent=70 // pred_check
          %p696 = pneg %p231
        $region73: #{tpu_custom_call.1} parent=70 // pred_check_branch
          %698 = sbr.rel (%p696) target = $region75
        $region74: #{tpu_custom_call.1} parent=70 // pred_region
          %s699 = sand.u32 %s216, 1
          %s700 = scalar_lea.sflag [#allocation4], %s699
          %s701 = sand.u32 %s216, 1
          %s702 = smul.addr %s701, 512
          %s703 = scalar_lea.vmem [#allocation10], %s702
          %704 = dma.done %s700, 8192
        $region75: #{tpu_custom_call.1} parent=70 // pred_fallthru
          _
      $region71: #{tpu_custom_call.1} parent=5 // pred_fallthru
        _
    $region6: #{tpu_custom_call.1} parent=1 // loop_footer
      %s25 = sadd.s32 1, %s21
    $region7: #{tpu_custom_call.1} parent=1 // loop_footer_branch
      %20 = sbr.rel target = $region3
    $region8: #{tpu_custom_call.1} parent=1 // loop_exit
      _
    %705 = vsyncpa [#allocation3], 1
    %s706 = scalar_lea.sflag [#allocation3], 1
    %707 = vsyncpa %s706, 1
    %708 = vsyncpa [#allocation6], 1
    %s709 = scalar_lea.sflag [#allocation6], 1
    %710 = vsyncpa %s709, 1
    %711 = vsyncpa [#allocation9], 1
    %712 = vsyncpa [#allocation4], 1
    %s713 = scalar_lea.sflag [#allocation4], 1
    %714 = vsyncpa %s713, 1

</llo_original>
